<compile_context>
chip_gen: v6e
topology: v6e:2x2x1
jax: 0.10.0
libtpu: 0.0.40
codegen_flags: <defaults>
</compile_context>

<pallas_src>
import functools

import jax
import jax.numpy as jnp
from jax.experimental import pallas as pl
from jax.experimental.pallas import tpu as pltpu


# --------------------------------------------------------------------------
# In-kernel helpers
# --------------------------------------------------------------------------
def _lane_partials(x_ref, valid):
    """Combine the first `valid` lanes of x_ref (bb, C, L) elementwise.

    Returns (psum, pmax, tail):
      psum/pmax: (bb, C, 128) float32 VPU-only partials over the full
                 128-lane chunks (None if valid < 128).
      tail:      (bb, C, valid % 128) float32 ragged remainder (None if the
                 chunk count divides evenly).
    Only lanes < `valid` are ever read, so stale VMEM in a partial block is
    never touched and no masking is required.
    """
    n_full = valid // 128
    rem = valid % 128

    psum = None
    pmax = None
    for i in range(n_full):
        chunk = x_ref[:, :, i * 128:(i + 1) * 128].astype(jnp.float32)
        psum = chunk if psum is None else psum + chunk
        pmax = chunk if pmax is None else jnp.maximum(pmax, chunk)

    tail = None
    if rem:
        tail = x_ref[:, :, n_full * 128:valid].astype(jnp.float32)
    return psum, pmax, tail


def _mlp_sigmoid(avg, mx, w1t_ref, w2t_ref, bb, out_dtype):
    """Fused avg/max shared-MLP + sigmoid: one fc1 and one fc2 matmul."""
    pooled = jnp.concatenate([avg, mx], axis=0)                     # (2*bb, C)
    h = jnp.maximum(
        jnp.dot(pooled, w1t_ref[...], preferred_element_type=jnp.float32),
        0.0)                                                        # (2*bb, Cr)
    out = jnp.dot(h, w2t_ref[...],
                  preferred_element_type=jnp.float32)               # (2*bb, C)
    return jax.nn.sigmoid(out[:bb] + out[bb:]).astype(out_dtype)    # (bb, C)


# --------------------------------------------------------------------------
# Kernels
# --------------------------------------------------------------------------
def _ca_single_pass_kernel(x_ref, w1t_ref, w2t_ref, o_ref, *, hw, bb):
    """Whole HW axis in one block; grid = (batch blocks,)."""
    psum, pmax, tail = _lane_partials(x_ref, hw)
    if psum is not None:
        s = jnp.sum(psum, axis=-1)                  # single cross-lane reduce
        m = jnp.max(pmax, axis=-1)
        if tail is not None:
            s = s + jnp.sum(tail, axis=-1)
            m = jnp.maximum(m, jnp.max(tail, axis=-1))
    else:                                           # HW < 128
        s = jnp.sum(tail, axis=-1)
        m = jnp.max(tail, axis=-1)
    avg = s * (1.0 / hw)
    o_ref[...] = _mlp_sigmoid(avg, m, w1t_ref, w2t_ref, bb, o_ref.dtype)


def _ca_stream_kernel(x_ref, w1t_ref, w2t_ref, o_ref, sum_acc, max_acc,
                      *, hw, t_hw, rem, bb):
    """HW streamed over the last ('arbitrary') grid axis; grid = (nb, n_hw)."""
    k = pl.program_id(1)
    nk = pl.num_programs(1)

    @pl.when(k == 0)
    def _init():
        sum_acc[...] = jnp.zeros_like(sum_acc)
        max_acc[...] = jnp.full_like(max_acc, -jnp.inf)

    # Hot path: full tiles only (t_hw is a multiple of 128 here) -> pure
    # vld + VPU add/max per vreg, no masking, no XLU work.
    @pl.when(k < nk - 1)
    def _hot():
        psum, pmax, _ = _lane_partials(x_ref, t_hw)
        sum_acc[...] += psum
        max_acc[...] = jnp.maximum(max_acc[...], pmax)

    # Last (possibly partial) tile + finalize.  Mutually exclusive with _hot,
    # so the tail tile is accumulated exactly once.
    @pl.when(k == nk - 1)
    def _last():
        psum, pmax, tail = _lane_partials(x_ref, rem)
        s128 = sum_acc[...]
        m128 = max_acc[...]
        if psum is not None:
            s128 = s128 + psum
            m128 = jnp.maximum(m128, pmax)
        s = jnp.sum(s128, axis=-1)                  # the only cross-lane reduce
        m = jnp.max(m128, axis=-1)
        if tail is not None:                        # ragged (<128-lane) tail
            s = s + jnp.sum(tail, axis=-1)
            m = jnp.maximum(m, jnp.max(tail, axis=-1))
        avg = s * (1.0 / hw)
        o_ref[...] = _mlp_sigmoid(avg, m, w1t_ref, w2t_ref, bb, o_ref.dtype)


# --------------------------------------------------------------------------
# Wrapper
# --------------------------------------------------------------------------
def channel_attention(x_nchw, w1, w2, *, x_budget_bytes=None):
    """x_nchw: (B, C, H, W) float32 / bfloat16
       w1: (C//ratio, C)  -- fc1 1x1 conv weight, squeezed
       w2: (C, C//ratio)  -- fc2 1x1 conv weight, squeezed
       returns: (B, C, 1, 1) sigmoid channel attention (dtype of x)."""
    B, C, H, W = x_nchw.shape
    Cr = w1.shape[0]
    HW = H * W
    itemsize = jnp.dtype(x_nchw.dtype).itemsize

    x3 = x_nchw.reshape(B, C, HW)
    w1t = jnp.transpose(w1).astype(jnp.float32)     # (C, Cr)
    w2t = jnp.transpose(w2).astype(jnp.float32)     # (Cr, C)

    # ---- per-generation VMEM budget for the double-buffered x stream ------
    try:
        vmem_cap = int(pltpu.get_tpu_info().vmem_capacity_bytes)
    except Exception:
        vmem_cap = 64 * 1024 * 1024
    if x_budget_bytes is None:
        if vmem_cap >= 128 * 1024 * 1024:           # v5e / v6e (128 MiB VMEM)
            x_budget_bytes = 32 * 1024 * 1024
        else:                                       # v7x (64 MiB per TC)
            x_budget_bytes = 20 * 1024 * 1024

    MAX_TILE_LANES = 256 * 128                      # bounds the unrolled chunk loop

    bb_min = 8 if B >= 8 else B
    pw = min(128, HW)                               # width of the VPU partials
    # Per batch row: double-buffered x + f32 sum/max partial accumulators.
    row_bytes = C * (2 * HW * itemsize + 2 * pw * 4)

    # ---- pick the HW tile ---------------------------------------------------
    if bb_min * row_bytes <= x_budget_bytes and HW <= MAX_TILE_LANES:
        t_hw = HW
    else:
        acc_bytes = 2 * bb_min * C * 128 * 4
        per_lane = 2 * bb_min * C * itemsize        # double-buffered bytes / lane
        t_hw = max(x_budget_bytes - acc_bytes, per_lane * 128) // per_lane
        t_hw = t_hw // 128 * 128
        t_hw = max(128, min(t_hw, MAX_TILE_LANES))
        if t_hw >= HW:
            t_hw = HW
    n_hw = pl.cdiv(HW, t_hw)
    rem_tile = HW - (n_hw - 1) * t_hw               # valid lanes of the last tile

    # ---- pick bb (batch rows per block) ------------------------------------
    if n_hw == 1:
        if B < 8:
            bb, b_pad = B, B                        # no padding, no wasted reads
        else:
            b8 = pl.cdiv(B, 8) * 8
            bb = min(b8, max(8, (x_budget_bytes // row_bytes) // 8 * 8))
            while b8 % bb:                          # bb must divide the padded batch
                bb -= 8
            # Keep >= 2 batch blocks when possible (v7x megacore), as long as
            # each block still moves >= 1 MiB.
            if b8 >= 16 and b8 // bb < 2:
                cand = (b8 // 2) // 8 * 8
                while cand >= 8 and b8 % cand:
                    cand -= 8
                if cand >= 8 and cand * C * HW * itemsize >= (1 << 20):
                    bb = cand
            b_pad = b8
    else:
        bb = bb_min
        b_pad = B if B < 8 else pl.cdiv(B, 8) * 8

    if b_pad != B:
        x3 = jnp.pad(x3, ((0, b_pad - B), (0, 0), (0, 0)))

    # ---- explicit VMEM limit from the actual buffer accounting --------------
    est_vmem = (2 * bb * C * t_hw * itemsize        # x double buffer
                + 4 * bb * C * pw * 4               # partials + accumulators (f32)
                + 4 * (2 * C * Cr) * 4              # both weights, double-buffered
                + 4 * bb * C * 4                    # pooled / MLP temps + out
                + (2 << 20))                        # compiler headroom
    vmem_limit = int(min(0.8 * vmem_cap,
                         max(2 * est_vmem, est_vmem + (16 << 20))))
    vmem_limit = max(vmem_limit, 16 << 20)

    cost = pl.CostEstimate(
        flops=int(3 * b_pad * C * HW + 8 * b_pad * C * Cr),
        transcendentals=int(b_pad * C),
        bytes_accessed=int(b_pad * C * HW * itemsize + 2 * C * Cr * 4
                           + b_pad * C * itemsize),
    )

    out_dtype = x_nchw.dtype

    if n_hw == 1:
        kernel = functools.partial(_ca_single_pass_kernel, hw=HW, bb=bb)
        grid = (b_pad // bb,)
        in_specs = [
            pl.BlockSpec((bb, C, t_hw), lambda b: (b, 0, 0)),
            pl.BlockSpec((C, Cr), lambda b: (0, 0)),
            pl.BlockSpec((Cr, C), lambda b: (0, 0)),
        ]
        out_specs = pl.BlockSpec((bb, C), lambda b: (b, 0))
        scratch = []
        dimsem = ("parallel",)
    else:
        kernel = functools.partial(_ca_stream_kernel, hw=HW, t_hw=t_hw,
                                   rem=rem_tile, bb=bb)
        grid = (b_pad // bb, n_hw)
        in_specs = [
            pl.BlockSpec((bb, C, t_hw), lambda b, k: (b, 0, k)),
            pl.BlockSpec((C, Cr), lambda b, k: (0, 0)),
            pl.BlockSpec((Cr, C), lambda b, k: (0, 0)),
        ]
        out_specs = pl.BlockSpec((bb, C), lambda b, k: (b, 0))
        scratch = [pltpu.VMEM((bb, C, 128), jnp.float32),   # running lane-partial sum
                   pltpu.VMEM((bb, C, 128), jnp.float32)]   # running lane-partial max
        dimsem = ("parallel", "arbitrary")

    out = pl.pallas_call(
        kernel,
        out_shape=jax.ShapeDtypeStruct((b_pad, C), out_dtype),
        grid_spec=pltpu.PrefetchScalarGridSpec(
            num_scalar_prefetch=0,
            grid=grid,
            in_specs=in_specs,
            out_specs=out_specs,
            scratch_shapes=scratch,
        ),
        compiler_params=pltpu.CompilerParams(
            dimension_semantics=dimsem,
            vmem_limit_bytes=int(vmem_limit)),
        cost_estimate=cost,
    )(x3, w1t, w2t)

    return out[:B].reshape(B, C, 1, 1)


# --------------------------------------------------------------------------
# Pure-JAX reference (mirrors the PyTorch forward)
# --------------------------------------------------------------------------
def reference_channel_attention(x, w1, w2):
    xf = x.astype(jnp.float32)
    avg = jnp.mean(xf, axis=(2, 3))                       # (B, C)
    mx = jnp.max(xf, axis=(2, 3))                         # (B, C)

    def mlp(p):
        h = jnp.maximum(p @ w1.T, 0.0)                    # (B, C//r)
        return h @ w2.T                                   # (B, C)

    out = jax.nn.sigmoid(mlp(avg) + mlp(mx))
    return out.reshape(*out.shape, 1, 1)


if __name__ == "__main__":
    key = jax.random.PRNGKey(0)
    kx, k1, k2 = jax.random.split(key, 3)

    # Canonical small CBAM shape (ratio=16).
    B, C, H, W = 2, 64, 16, 16
    ratio = 16
    Cr = C // ratio

    x = jax.random.normal(kx, (B, C, H, W), dtype=jnp.float32)
    w1 = jax.random.normal(k1, (Cr, C), dtype=jnp.float32) * (1.0 / jnp.sqrt(C))
    w2 = jax.random.normal(k2, (C, Cr), dtype=jnp.float32) * (1.0 / jnp.sqrt(Cr))

    # 1) single-pass path (whole HW in one block).
    out = jax.block_until_ready(channel_attention(x, w1, w2))
    ref = reference_channel_attention(x, w1, w2)
    assert out.shape == (B, C, 1, 1)
    assert jnp.allclose(out, ref, atol=1e-5, rtol=1e-5), "single-pass mismatch"

    # 2) ragged HW (not a multiple of 128) and batch not a multiple of 8.
    x2 = jax.random.normal(kx, (3, C, 20, 13), dtype=jnp.float32)
    out2 = jax.block_until_ready(channel_attention(x2, w1, w2))
    ref2 = reference_channel_attention(x2, w1, w2)
    assert jnp.allclose(out2, ref2, atol=1e-5, rtol=1e-5), "ragged-HW mismatch"

    # 3) forced streaming path (tiny budget) with a partial last HW tile.
    x3 = jax.random.normal(kx, (2, C, 20, 20), dtype=jnp.float32)
    out3 = jax.block_until_ready(
        channel_attention(x3, w1, w2, x_budget_bytes=512 * 1024))
    ref3 = reference_channel_attention(x3, w1, w2)
    assert jnp.allclose(out3, ref3, atol=1e-5, rtol=1e-5), "streaming mismatch"

    # 4) bf16 streaming input (halves HBM bytes); accumulation stays f32.
    xb = x.astype(jnp.bfloat16)
    out4 = jax.block_until_ready(channel_attention(xb, w1, w2))
    ref4 = reference_channel_attention(xb, w1, w2)
    assert out4.dtype == jnp.bfloat16
    assert jnp.allclose(out4.astype(jnp.float32), ref4, atol=2e-2), "bf16 mismatch"

    print("KERNEL_OK")
</pallas_src>

<mosaic_0001>
module attributes {stable_mosaic.version = 11 : i64} {
  func.func @_ca_single_pass_kernel(%arg0: i32, %arg1: memref<2x64x256xf32, #tpu.memory_space<vmem>>, %arg2: memref<64x4xf32, #tpu.memory_space<vmem>>, %arg3: memref<4x64xf32, #tpu.memory_space<vmem>>, %arg4: memref<2x64xf32, #tpu.memory_space<vmem>>) attributes {dimension_semantics = [#tpu.dimension_semantics<parallel>], iteration_bounds = array<i64: 1>, scalar_prefetch = 0 : i64, scratch_operands = 0 : i64, tpu.core_type = #tpu.core_type<tc>, window_params = [{transform_indices = @transform_0, window_bounds = array<i64: 2, 64, 256>}, {pipeline_mode = #tpu.pipeline_mode<synchronous>, transform_indices = @transform_1, window_bounds = array<i64: 64, 4>}, {pipeline_mode = #tpu.pipeline_mode<synchronous>, transform_indices = @transform_2, window_bounds = array<i64: 4, 64>}, {transform_indices = @transform_3, window_bounds = array<i64: 2, 64>}]} {
    %c0 = arith.constant 0 : index
    %c0_0 = arith.constant 0 : index
    %c0_1 = arith.constant 0 : index
    %0 = vector.load %arg1[%c0, %c0_0, %c0_1] : memref<2x64x256xf32, #tpu.memory_space<vmem>>, vector<2x64x128xf32>
    %c0_2 = arith.constant 0 : index
    %c0_3 = arith.constant 0 : index
    %c128 = arith.constant 128 : index
    %1 = vector.load %arg1[%c0_2, %c0_3, %c128] : memref<2x64x256xf32, #tpu.memory_space<vmem>>, vector<2x64x128xf32>
    %2 = arith.addf %0, %1 : vector<2x64x128xf32>
    %3 = arith.maximumf %0, %1 : vector<2x64x128xf32>
    %cst = arith.constant dense<0.000000e+00> : vector<2x64xf32>
    %4 = vector.multi_reduction <add>, %2, %cst [2] : vector<2x64x128xf32> to vector<2x64xf32>
    %cst_4 = arith.constant dense<0xFF800000> : vector<2x64xf32>
    %5 = vector.multi_reduction <maximumf>, %3, %cst_4 [2] : vector<2x64x128xf32> to vector<2x64xf32>
    %cst_5 = arith.constant 3.906250e-03 : f32
    %6 = vector.broadcast %cst_5 : f32 to vector<2x64xf32>
    %7 = arith.mulf %4, %6 : vector<2x64xf32>
    %8 = tpu.concatenate %7, %5 in 0 : vector<2x64xf32>, vector<2x64xf32> -> vector<4x64xf32>
    %c0_6 = arith.constant 0 : index
    %c0_7 = arith.constant 0 : index
    %9 = vector.load %arg2[%c0_6, %c0_7] : memref<64x4xf32, #tpu.memory_space<vmem>>, vector<64x4xf32>
    %cst_8 = arith.constant dense<0.000000e+00> : vector<4x4xf32>
    %10 = tpu.matmul %8, %9, %cst_8 {dimension_numbers = #tpu.dot_dimension_numbers<[1], [0], [0], [1], [0, 0, 1, 1], [], []>} : vector<4x64xf32>, vector<64x4xf32>, vector<4x4xf32> -> vector<4x4xf32>
    %cst_9 = arith.constant 0.000000e+00 : f32
    %11 = vector.broadcast %cst_9 : f32 to vector<4x4xf32>
    %12 = arith.maximumf %10, %11 : vector<4x4xf32>
    %c0_10 = arith.constant 0 : index
    %c0_11 = arith.constant 0 : index
    %13 = vector.load %arg3[%c0_10, %c0_11] : memref<4x64xf32, #tpu.memory_space<vmem>>, vector<4x64xf32>
    %cst_12 = arith.constant dense<0.000000e+00> : vector<4x64xf32>
    %14 = tpu.matmul %12, %13, %cst_12 {dimension_numbers = #tpu.dot_dimension_numbers<[1], [0], [0], [1], [0, 0, 1, 1], [], []>} : vector<4x4xf32>, vector<4x64xf32>, vector<4x64xf32> -> vector<4x64xf32>
    %15 = vector.extract_strided_slice %14 {offsets = [0, 0], sizes = [2, 64], strides = [1, 1]} : vector<4x64xf32> to vector<2x64xf32>
    %16 = vector.extract_strided_slice %14 {offsets = [2, 0], sizes = [2, 64], strides = [1, 1]} : vector<4x64xf32> to vector<2x64xf32>
    %17 = arith.addf %15, %16 : vector<2x64xf32>
    %18 = arith.negf %17 : vector<2x64xf32>
    %19 = math.exp %18 : vector<2x64xf32>
    %cst_13 = arith.constant 1.000000e+00 : f32
    %20 = vector.broadcast %cst_13 : f32 to vector<2x64xf32>
    %21 = arith.addf %20, %19 : vector<2x64xf32>
    %22 = arith.divf %20, %21 : vector<2x64xf32>
    %c0_14 = arith.constant 0 : index
    %c0_15 = arith.constant 0 : index
    %23 = vector.load %arg4[%c0_14, %c0_15] : memref<2x64xf32, #tpu.memory_space<vmem>>, vector<2x64xf32>
    tpu.vector_store %arg4[%c0_14, %c0_15], %22 {strides = array<i32>} : memref<2x64xf32, #tpu.memory_space<vmem>>, vector<2x64xf32>,
    return
  }
  func.func @transform_0(%arg0: i32) -> (i32, i32, i32) {
    %c0_i32 = arith.constant 0 : i32
    %c0_i32_0 = arith.constant 0 : i32
    %c0_i32_1 = arith.constant 0 : i32
    return %arg0, %c0_i32, %c0_i32_0 : i32, i32, i32
  }
  func.func @transform_1(%arg0: i32) -> (i32, i32) {
    %c0_i32 = arith.constant 0 : i32
    %c0_i32_0 = arith.constant 0 : i32
    %c0_i32_1 = arith.constant 0 : i32
    return %c0_i32, %c0_i32_0 : i32, i32
  }
  func.func @transform_2(%arg0: i32) -> (i32, i32) {
    %c0_i32 = arith.constant 0 : i32
    %c0_i32_0 = arith.constant 0 : i32
    %c0_i32_1 = arith.constant 0 : i32
    return %c0_i32, %c0_i32_0 : i32, i32
  }
  func.func @transform_3(%arg0: i32) -> (i32, i32) {
    %c0_i32 = arith.constant 0 : i32
    %c0_i32_0 = arith.constant 0 : i32
    return %arg0, %c0_i32 : i32, i32
  }
}

</mosaic_0001>

<llo_original>
// kernel: tpu_custom_call.1
$region0: #{tpu_custom_call.1}
  #allocation0 [shape = 'u32[]', space=smem, size = 0x4, offset = 0x4, fixed_abs, tag = 'smem constant byte address 0x4 - core index']
  #allocation1 [shape = 'u32[144,128]{1,0:T(1,128)}', space=vmem, size = 0x12000, scoped, tag = 'internal scratch']
  %s0 = inlined_call_operand.hbm [shape: f32[2,64,256], index: 0, kind: input, shape index: {}]
  %s1 = inlined_call_operand.vmem [shape: f32[64,4], index: 1, kind: input, shape index: {}]
  %s2 = inlined_call_operand.vmem [shape: f32[4,64], index: 2, kind: input, shape index: {}]
  %s3 = inlined_call_operand.hbm [shape: f32[2,64], index: 3, kind: output, shape index: {}]
  %s4 = sld [smem:[#allocation0]]
  $region26: #{tpu_custom_call.1} parent=0
    _
  %s6 = ssub.s32 1, %s4
  %s7 = scalar_select 0, %s6, %s4
  $region1: #{tpu_custom_call.1} parent=0
    #allocation2 [shape = 'u8[131072]{0}', space=vmem, size = 0x20000, scoped, tag = 'input window, operand 0, single buffered']
    #allocation3 [shape = 's32[1]{0}', space=sflag, size = 0x4, scoped, tag = 'scoped memory for tpu_custom_call.1']
    #allocation4 [shape = 's32[1]{0}', space=sflag, size = 0x4, scoped, tag = 'scoped memory for tpu_custom_call.1']
    #allocation5 [shape = 'u8[1024]{0}', space=vmem, size = 0x400, scoped, tag = 'output window, operand 0, single buffered']
    %8 = vsyncpa [#allocation3], 0
    %9 = vsyncpa [#allocation4], 0
    // Predicated region
    $region2: #{tpu_custom_call.1} parent=1 // pred_check
      _
    $region3: #{tpu_custom_call.1} parent=1 // pred_check_branch
      %11 = sbr.rel (0) target = $region5
    $region4: #{tpu_custom_call.1} parent=1 // pred_region
      %s13 = ssub.s32 4096, 4096
      %14 = vsyncadd [#allocation3], %s13
      %s15 = sshll.u32 [#allocation2], 4
      %s16 = int_to_ptr.vmem [resolvable:$true] %s15
      %21 = dma.hbm_to_vmem [thread:$0]  %s0, 4096, %s16, [#allocation3], 256, 256, 16
    $region5: #{tpu_custom_call.1} parent=1 // pred_fallthru
      _
    // Predicated region
    $region6: #{tpu_custom_call.1} parent=1 // pred_check
      _
    $region7: #{tpu_custom_call.1} parent=1 // pred_check_branch
      %23 = sbr.rel (0) target = $region9
    $region8: #{tpu_custom_call.1} parent=1 // pred_region
      _
    $region9: #{tpu_custom_call.1} parent=1 // pred_fallthru
      _
    // Predicated region
    $region10: #{tpu_custom_call.1} parent=1 // pred_check
      _
    $region11: #{tpu_custom_call.1} parent=1 // pred_check_branch
      %25 = sbr.rel (0) target = $region13
    $region12: #{tpu_custom_call.1} parent=1 // pred_region
      _
    $region13: #{tpu_custom_call.1} parent=1 // pred_fallthru
      _
    // Predicated region
    $region14: #{tpu_custom_call.1} parent=1 // pred_check
      _
    $region15: #{tpu_custom_call.1} parent=1 // pred_check_branch
      %27 = sbr.rel (0) target = $region17
    $region16: #{tpu_custom_call.1} parent=1 // pred_region
      %28 = dma.done [#allocation3], 4096
    $region17: #{tpu_custom_call.1} parent=1 // pred_fallthru
      _
    %v29 = vld [vmem:[#allocation2] sm:$0xff]
    %v30 = vld [vmem:[#allocation2 + $0x10] sm:$0xff]
    %v31 = vld [vmem:[#allocation2 + $0x20] sm:$0xff]
    %v32 = vld [vmem:[#allocation2 + $0x30] sm:$0xff]
    %v33 = vld [vmem:[#allocation2 + $0x40] sm:$0xff]
    %v34 = vld [vmem:[#allocation2 + $0x50] sm:$0xff]
    %v35 = vld [vmem:[#allocation2 + $0x60] sm:$0xff]
    %v36 = vld [vmem:[#allocation2 + $0x70] sm:$0xff]
    %v37 = vld [vmem:[#allocation2 + $0x80] sm:$0xff]
    %v38 = vld [vmem:[#allocation2 + $0x90] sm:$0xff]
    %v39 = vld [vmem:[#allocation2 + $0xa0] sm:$0xff]
    %v40 = vld [vmem:[#allocation2 + $0xb0] sm:$0xff]
    %v41 = vld [vmem:[#allocation2 + $0xc0] sm:$0xff]
    %v42 = vld [vmem:[#allocation2 + $0xd0] sm:$0xff]
    %v43 = vld [vmem:[#allocation2 + $0xe0] sm:$0xff]
    %v44 = vld [vmem:[#allocation2 + $0xf0] sm:$0xff]
    %v45 = vld [vmem:[#allocation2 + $0x8] sm:$0xff]
    %v46 = vld [vmem:[#allocation2 + $0x18] sm:$0xff]
    %v47 = vld [vmem:[#allocation2 + $0x28] sm:$0xff]
    %v48 = vld [vmem:[#allocation2 + $0x38] sm:$0xff]
    %v49 = vld [vmem:[#allocation2 + $0x48] sm:$0xff]
    %v50 = vld [vmem:[#allocation2 + $0x58] sm:$0xff]
    %v51 = vld [vmem:[#allocation2 + $0x68] sm:$0xff]
    %v52 = vld [vmem:[#allocation2 + $0x78] sm:$0xff]
    %v53 = vld [vmem:[#allocation2 + $0x88] sm:$0xff]
    %v54 = vld [vmem:[#allocation2 + $0x98] sm:$0xff]
    %v55 = vld [vmem:[#allocation2 + $0xa8] sm:$0xff]
    %v56 = vld [vmem:[#allocation2 + $0xb8] sm:$0xff]
    %v57 = vld [vmem:[#allocation2 + $0xc8] sm:$0xff]
    %v58 = vld [vmem:[#allocation2 + $0xd8] sm:$0xff]
    %v59 = vld [vmem:[#allocation2 + $0xe8] sm:$0xff]
    %v60 = vld [vmem:[#allocation2 + $0xf8] sm:$0xff]
    %v61 = vadd.f32 %v29, %v45
    %v62 = vadd.f32 %v30, %v46
    %v63 = vadd.f32 %v31, %v47
    %v64 = vadd.f32 %v32, %v48
    %v65 = vadd.f32 %v33, %v49
    %v66 = vadd.f32 %v34, %v50
    %v67 = vadd.f32 %v35, %v51
    %v68 = vadd.f32 %v36, %v52
    %v69 = vadd.f32 %v37, %v53
    %v70 = vadd.f32 %v38, %v54
    %v71 = vadd.f32 %v39, %v55
    %v72 = vadd.f32 %v40, %v56
    %v73 = vadd.f32 %v41, %v57
    %v74 = vadd.f32 %v42, %v58
    %v75 = vadd.f32 %v43, %v59
    %v76 = vadd.f32 %v44, %v60
    %v77 = vmax.f32 %v29, %v45
    %v78 = vmax.f32 %v30, %v46
    %v79 = vmax.f32 %v31, %v47
    %v80 = vmax.f32 %v32, %v48
    %v81 = vmax.f32 %v33, %v49
    %v82 = vmax.f32 %v34, %v50
    %v83 = vmax.f32 %v35, %v51
    %v84 = vmax.f32 %v36, %v52
    %v85 = vmax.f32 %v37, %v53
    %v86 = vmax.f32 %v38, %v54
    %v87 = vmax.f32 %v39, %v55
    %v88 = vmax.f32 %v40, %v56
    %v89 = vmax.f32 %v41, %v57
    %v90 = vmax.f32 %v42, %v58
    %v91 = vmax.f32 %v43, %v59
    %v92 = vmax.f32 %v44, %v60
    %93 = vadd.xlane.f32.xlu0 %v61
    %v94 = vpop.xlane.xlu0 %93
    %95 = vadd.xlane.f32.xlu0 %v62
    %v96 = vpop.xlane.xlu0 %95
    %97 = vadd.xlane.f32.xlu0 %v63
    %v98 = vpop.xlane.xlu0 %97
    %99 = vadd.xlane.f32.xlu0 %v64
    %v100 = vpop.xlane.xlu0 %99
    %101 = vadd.xlane.f32.xlu0 %v65
    %v102 = vpop.xlane.xlu0 %101
    %103 = vadd.xlane.f32.xlu0 %v66
    %v104 = vpop.xlane.xlu0 %103
    %105 = vadd.xlane.f32.xlu0 %v67
    %v106 = vpop.xlane.xlu0 %105
    %107 = vadd.xlane.f32.xlu0 %v68
    %v108 = vpop.xlane.xlu0 %107
    %109 = vadd.xlane.f32.xlu0 %v69
    %v110 = vpop.xlane.xlu0 %109
    %111 = vadd.xlane.f32.xlu0 %v70
    %v112 = vpop.xlane.xlu0 %111
    %113 = vadd.xlane.f32.xlu0 %v71
    %v114 = vpop.xlane.xlu0 %113
    %115 = vadd.xlane.f32.xlu0 %v72
    %v116 = vpop.xlane.xlu0 %115
    %117 = vadd.xlane.f32.xlu0 %v73
    %v118 = vpop.xlane.xlu0 %117
    %119 = vadd.xlane.f32.xlu0 %v74
    %v120 = vpop.xlane.xlu0 %119
    %121 = vadd.xlane.f32.xlu0 %v75
    %v122 = vpop.xlane.xlu0 %121
    %123 = vadd.xlane.f32.xlu0 %v76
    %v124 = vpop.xlane.xlu0 %123
    %125 = vmax.xlane.f32.xlu0 %v77
    %v126 = vpop.xlane.xlu0 %125
    %127 = vmax.xlane.f32.xlu0 %v78
    %v128 = vpop.xlane.xlu0 %127
    %129 = vmax.xlane.f32.xlu0 %v79
    %v130 = vpop.xlane.xlu0 %129
    %131 = vmax.xlane.f32.xlu0 %v80
    %v132 = vpop.xlane.xlu0 %131
    %133 = vmax.xlane.f32.xlu0 %v81
    %v134 = vpop.xlane.xlu0 %133
    %135 = vmax.xlane.f32.xlu0 %v82
    %v136 = vpop.xlane.xlu0 %135
    %137 = vmax.xlane.f32.xlu0 %v83
    %v138 = vpop.xlane.xlu0 %137
    %139 = vmax.xlane.f32.xlu0 %v84
    %v140 = vpop.xlane.xlu0 %139
    %141 = vmax.xlane.f32.xlu0 %v85
    %v142 = vpop.xlane.xlu0 %141
    %143 = vmax.xlane.f32.xlu0 %v86
    %v144 = vpop.xlane.xlu0 %143
    %145 = vmax.xlane.f32.xlu0 %v87
    %v146 = vpop.xlane.xlu0 %145
    %147 = vmax.xlane.f32.xlu0 %v88
    %v148 = vpop.xlane.xlu0 %147
    %149 = vmax.xlane.f32.xlu0 %v89
    %v150 = vpop.xlane.xlu0 %149
    %151 = vmax.xlane.f32.xlu0 %v90
    %v152 = vpop.xlane.xlu0 %151
    %153 = vmax.xlane.f32.xlu0 %v91
    %v154 = vpop.xlane.xlu0 %153
    %155 = vmax.xlane.f32.xlu0 %v92
    %v156 = vpop.xlane.xlu0 %155
    %v157 = vmul.f32 %v94, 0.00390625
    %v158 = vmul.f32 %v96, 0.00390625
    %v159 = vmul.f32 %v98, 0.00390625
    %v160 = vmul.f32 %v100, 0.00390625
    %v161 = vmul.f32 %v102, 0.00390625
    %v162 = vmul.f32 %v104, 0.00390625
    %v163 = vmul.f32 %v106, 0.00390625
    %v164 = vmul.f32 %v108, 0.00390625
    %v165 = vmul.f32 %v110, 0.00390625
    %v166 = vmul.f32 %v112, 0.00390625
    %v167 = vmul.f32 %v114, 0.00390625
    %v168 = vmul.f32 %v116, 0.00390625
    %v169 = vmul.f32 %v118, 0.00390625
    %v170 = vmul.f32 %v120, 0.00390625
    %v171 = vmul.f32 %v122, 0.00390625
    %v172 = vmul.f32 %v124, 0.00390625
    %v189 = vlaneseq
    %v190 = vand.u32 %v189, 127
    %v191 = vlaneseq
    %v192 = vshrl.u32 %v191, 7
    %v193 = vsub.s32 %v190, %v192
    %v194 = vrot.slane %v157, %v193
    %v195 = vadd.s32 %v190, 4294967288
    %v196 = vlaneseq
    %v197 = vshrl.u32 %v196, 7
    %v198 = vsub.s32 %v195, %v197
    %v199 = vrot.slane %v158, %v198
    %vm200 = vcmask 130112
    %v201 = vsel %vm200, %v199, %v194
    %v202 = vadd.s32 %v190, 4294967280
    %v203 = vlaneseq
    %v204 = vshrl.u32 %v203, 7
    %v205 = vsub.s32 %v202, %v204
    %v206 = vrot.slane %v159, %v205
    %vm207 = vcmask 195712
    %v208 = vsel %vm207, %v206, %v201
    %v209 = vadd.s32 %v190, 4294967272
    %v210 = vlaneseq
    %v211 = vshrl.u32 %v210, 7
    %v212 = vsub.s32 %v209, %v211
    %v213 = vrot.slane %v160, %v212
    %vm214 = vcmask 261312
    %v215 = vsel %vm214, %v213, %v208
    %v216 = vadd.s32 %v190, 4294967264
    %v217 = vlaneseq
    %v218 = vshrl.u32 %v217, 7
    %v219 = vsub.s32 %v216, %v218
    %v220 = vrot.slane %v161, %v219
    %vm221 = vcmask 326912
    %v222 = vsel %vm221, %v220, %v215
    %v223 = vadd.s32 %v190, 4294967256
    %v224 = vlaneseq
    %v225 = vshrl.u32 %v224, 7
    %v226 = vsub.s32 %v223, %v225
    %v227 = vrot.slane %v162, %v226
    %vm228 = vcmask 392512
    %v229 = vsel %vm228, %v227, %v222
    %v230 = vadd.s32 %v190, 4294967248
    %v231 = vlaneseq
    %v232 = vshrl.u32 %v231, 7
    %v233 = vsub.s32 %v230, %v232
    %v234 = vrot.slane %v163, %v233
    %vm235 = vcmask 458112
    %v236 = vsel %vm235, %v234, %v229
    %v237 = vadd.s32 %v190, 4294967240
    %v238 = vlaneseq
    %v239 = vshrl.u32 %v238, 7
    %v240 = vsub.s32 %v237, %v239
    %v241 = vrot.slane %v164, %v240
    %vm242 = vcmask 523712
    %v243 = vsel %vm242, %v241, %v236
    %v244 = vlaneseq
    %v245 = vshrl.u32 %v244, 7
    %v246 = vsub.s32 %v190, %v245
    %v247 = vrot.slane %v165, %v246
    %v248 = vlaneseq
    %v249 = vshrl.u32 %v248, 7
    %v250 = vsub.s32 %v195, %v249
    %v251 = vrot.slane %v166, %v250
    %v252 = vsel %vm200, %v251, %v247
    %v253 = vlaneseq
    %v254 = vshrl.u32 %v253, 7
    %v255 = vsub.s32 %v202, %v254
    %v256 = vrot.slane %v167, %v255
    %v257 = vsel %vm207, %v256, %v252
    %v258 = vlaneseq
    %v259 = vshrl.u32 %v258, 7
    %v260 = vsub.s32 %v209, %v259
    %v261 = vrot.slane %v168, %v260
    %v262 = vsel %vm214, %v261, %v257
    %v263 = vlaneseq
    %v264 = vshrl.u32 %v263, 7
    %v265 = vsub.s32 %v216, %v264
    %v266 = vrot.slane %v169, %v265
    %v267 = vsel %vm221, %v266, %v262
    %v268 = vlaneseq
    %v269 = vshrl.u32 %v268, 7
    %v270 = vsub.s32 %v223, %v269
    %v271 = vrot.slane %v170, %v270
    %v272 = vsel %vm228, %v271, %v267
    %v273 = vlaneseq
    %v274 = vshrl.u32 %v273, 7
    %v275 = vsub.s32 %v230, %v274
    %v276 = vrot.slane %v171, %v275
    %v277 = vsel %vm235, %v276, %v272
    %v278 = vlaneseq
    %v279 = vshrl.u32 %v278, 7
    %v280 = vsub.s32 %v237, %v279
    %v281 = vrot.slane %v172, %v280
    %v282 = vsel %vm242, %v281, %v277
    %vm283 = vcmask 1041409
    %v284 = vsel %vm283, %v282, %v243
    %v302 = vlaneseq
    %v303 = vshrl.u32 %v302, 7
    %v304 = vsub.s32 %v190, %v303
    %v305 = vrot.slane %v126, %v304
    %v306 = vlaneseq
    %v307 = vshrl.u32 %v306, 7
    %v308 = vsub.s32 %v195, %v307
    %v309 = vrot.slane %v128, %v308
    %v310 = vsel %vm200, %v309, %v305
    %v311 = vlaneseq
    %v312 = vshrl.u32 %v311, 7
    %v313 = vsub.s32 %v202, %v312
    %v314 = vrot.slane %v130, %v313
    %v315 = vsel %vm207, %v314, %v310
    %v316 = vlaneseq
    %v317 = vshrl.u32 %v316, 7
    %v318 = vsub.s32 %v209, %v317
    %v319 = vrot.slane %v132, %v318
    %v320 = vsel %vm214, %v319, %v315
    %v321 = vlaneseq
    %v322 = vshrl.u32 %v321, 7
    %v323 = vsub.s32 %v216, %v322
    %v324 = vrot.slane %v134, %v323
    %v325 = vsel %vm221, %v324, %v320
    %v326 = vlaneseq
    %v327 = vshrl.u32 %v326, 7
    %v328 = vsub.s32 %v223, %v327
    %v329 = vrot.slane %v136, %v328
    %v330 = vsel %vm228, %v329, %v325
    %v331 = vlaneseq
    %v332 = vshrl.u32 %v331, 7
    %v333 = vsub.s32 %v230, %v332
    %v334 = vrot.slane %v138, %v333
    %v335 = vsel %vm235, %v334, %v330
    %v336 = vlaneseq
    %v337 = vshrl.u32 %v336, 7
    %v338 = vsub.s32 %v237, %v337
    %v339 = vrot.slane %v140, %v338
    %v340 = vsel %vm242, %v339, %v335
    %v341 = vlaneseq
    %v342 = vshrl.u32 %v341, 7
    %v343 = vsub.s32 %v190, %v342
    %v344 = vrot.slane %v142, %v343
    %v345 = vlaneseq
    %v346 = vshrl.u32 %v345, 7
    %v347 = vsub.s32 %v195, %v346
    %v348 = vrot.slane %v144, %v347
    %v349 = vsel %vm200, %v348, %v344
    %v350 = vlaneseq
    %v351 = vshrl.u32 %v350, 7
    %v352 = vsub.s32 %v202, %v351
    %v353 = vrot.slane %v146, %v352
    %v354 = vsel %vm207, %v353, %v349
    %v355 = vlaneseq
    %v356 = vshrl.u32 %v355, 7
    %v357 = vsub.s32 %v209, %v356
    %v358 = vrot.slane %v148, %v357
    %v359 = vsel %vm214, %v358, %v354
    %v360 = vlaneseq
    %v361 = vshrl.u32 %v360, 7
    %v362 = vsub.s32 %v216, %v361
    %v363 = vrot.slane %v150, %v362
    %v364 = vsel %vm221, %v363, %v359
    %v365 = vlaneseq
    %v366 = vshrl.u32 %v365, 7
    %v367 = vsub.s32 %v223, %v366
    %v368 = vrot.slane %v152, %v367
    %v369 = vsel %vm228, %v368, %v364
    %v370 = vlaneseq
    %v371 = vshrl.u32 %v370, 7
    %v372 = vsub.s32 %v230, %v371
    %v373 = vrot.slane %v154, %v372
    %v374 = vsel %vm235, %v373, %v369
    %v375 = vlaneseq
    %v376 = vshrl.u32 %v375, 7
    %v377 = vsub.s32 %v237, %v376
    %v378 = vrot.slane %v156, %v377
    %v379 = vsel %vm242, %v378, %v374
    %vm380 = vcmask 1043459
    %v381 = vsel %vm380, %v379, %v340
    %vm383 = vcmask 1041408
    %v384 = vsel %vm383, %v284, %v381
    %v385 = vld [vmem:[%s1] sm:$0xff]
    %v386 = vld [vmem:[%s1 + $0x8] sm:$0xff]
    %v387 = vld [vmem:[%s1 + $0x10] sm:$0xff]
    %v388 = vld [vmem:[%s1 + $0x18] sm:$0xff]
    %v389 = vld [vmem:[%s1 + $0x20] sm:$0xff]
    %v390 = vld [vmem:[%s1 + $0x28] sm:$0xff]
    %v391 = vld [vmem:[%s1 + $0x30] sm:$0xff]
    %v392 = vld [vmem:[%s1 + $0x38] sm:$0xff]
    %vm393 = vcmask 523264
    %v395 = vsel %vm393, %v384, 0
    %397 = vmatprep.subr.mxu0 0.0
    %398 = vmatpush1.msra.mxu0 0.0
    %399 = vmatprep.subr.mxu0 0.0
    %400 = vmatpush1.msra.mxu0 0.0
    %401 = vmatprep.subr.mxu0 0.0
    %402 = vmatpush1.msra.mxu0 0.0
    %403 = vmatprep.subr.mxu0 0.0
    %404 = vmatpush1.msra.mxu0 0.0
    %405 = vmatprep.subr.mxu0 0.0
    %406 = vmatpush1.msra.mxu0 0.0
    %407 = vmatprep.subr.mxu0 0.0
    %408 = vmatpush1.msra.mxu0 0.0
    %409 = vmatprep.subr.mxu0 0.0
    %410 = vmatpush1.msra.mxu0 0.0
    %411 = vmatprep.subr.mxu0 0.0
    %412 = vmatpush1.msra.mxu0 0.0
    %413 = vmatprep.subr.mxu0 0.0
    %414 = vmatpush1.msra.mxu0 %v392
    %415 = vmatprep.subr.mxu0 0.0
    %416 = vmatpush1.msra.mxu0 %v391
    %417 = vmatprep.subr.mxu0 0.0
    %418 = vmatpush1.msra.mxu0 %v390
    %419 = vmatprep.subr.mxu0 0.0
    %420 = vmatpush1.msra.mxu0 %v389
    %421 = vmatprep.subr.mxu0 0.0
    %422 = vmatpush1.msra.mxu0 %v388
    %423 = vmatprep.subr.mxu0 0.0
    %424 = vmatpush1.msra.mxu0 %v387
    %425 = vmatprep.subr.mxu0 0.0
    %426 = vmatpush1.msra.mxu0 %v386
    %427 = vmatprep.subr.mxu0 0.0
    %428 = vmatpush1.msra.mxu0 %v385
    %429 = vmatprep.subr.mxu0 0.0
    %430 = vmatpush2.msra.mxu0 0.0
    %431 = vmatprep.subr.mxu0 0.0
    %432 = vmatpush2.msra.mxu0 0.0
    %433 = vmatprep.subr.mxu0 0.0
    %434 = vmatpush2.msra.mxu0 0.0
    %435 = vmatprep.subr.mxu0 0.0
    %436 = vmatpush2.msra.mxu0 0.0
    %437 = vmatprep.subr.mxu0 0.0
    %438 = vmatpush2.msra.mxu0 0.0
    %439 = vmatprep.subr.mxu0 0.0
    %440 = vmatpush2.msra.mxu0 0.0
    %441 = vmatprep.subr.mxu0 0.0
    %442 = vmatpush2.msra.mxu0 0.0
    %443 = vmatprep.subr.mxu0 0.0
    %444 = vmatpush2.msra.mxu0 0.0
    %445 = vmatprep.subr.mxu0 0.0
    %446 = vmatpush2.msra.mxu0 0.0
    %447 = vmatprep.subr.mxu0 0.0
    %448 = vmatpush2.msra.mxu0 0.0
    %449 = vmatprep.subr.mxu0 0.0
    %450 = vmatpush2.msra.mxu0 0.0
    %451 = vmatprep.subr.mxu0 0.0
    %452 = vmatpush2.msra.mxu0 0.0
    %453 = vmatprep.subr.mxu0 0.0
    %454 = vmatpush2.msra.mxu0 0.0
    %455 = vmatprep.subr.mxu0 0.0
    %456 = vmatpush2.msra.mxu0 0.0
    %457 = vmatprep.subr.mxu0 0.0
    %458 = vmatpush2.msra.mxu0 0.0
    %459 = vmatprep.subr.mxu0 0.0
    %460 = vmatpush2.msra.mxu0 0.0
    %461 = vmatprep.mubr.f32.mxu0 0.0
    %462 = vmatmul.mubr.f32.gmra.mxu0 %v395
    %v463 = vpop.f32.mrf.mxu0
    %v464 = vadd.f32 0.0, %v463
    %v465 = vpop.f32.mrf.mxu0
    %466 = vdwg.mxu0
    %v467 = vmax.f32 %v464, 0.0
    %v468 = vld [vmem:[%s2] sm:$0xf]
    %vm469 = vcmask 31744
    %v471 = vsel %vm469, %v467, 0
    %vm473 = vcmask 1043456
    %v475 = vsel %vm473, %v468, 0
    %477 = vmatprep.subr.mxu0 0.0
    %478 = vmatpush1.msra.mxu0 0.0
    %479 = vmatprep.subr.mxu0 0.0
    %480 = vmatpush1.msra.mxu0 0.0
    %481 = vmatprep.subr.mxu0 0.0
    %482 = vmatpush1.msra.mxu0 0.0
    %483 = vmatprep.subr.mxu0 0.0
    %484 = vmatpush1.msra.mxu0 0.0
    %485 = vmatprep.subr.mxu0 0.0
    %486 = vmatpush1.msra.mxu0 0.0
    %487 = vmatprep.subr.mxu0 0.0
    %488 = vmatpush1.msra.mxu0 0.0
    %489 = vmatprep.subr.mxu0 0.0
    %490 = vmatpush1.msra.mxu0 0.0
    %491 = vmatprep.subr.mxu0 0.0
    %492 = vmatpush1.msra.mxu0 0.0
    %493 = vmatprep.subr.mxu0 0.0
    %494 = vmatpush1.msra.mxu0 0.0
    %495 = vmatprep.subr.mxu0 0.0
    %496 = vmatpush1.msra.mxu0 0.0
    %497 = vmatprep.subr.mxu0 0.0
    %498 = vmatpush1.msra.mxu0 0.0
    %499 = vmatprep.subr.mxu0 0.0
    %500 = vmatpush1.msra.mxu0 0.0
    %501 = vmatprep.subr.mxu0 0.0
    %502 = vmatpush1.msra.mxu0 0.0
    %503 = vmatprep.subr.mxu0 0.0
    %504 = vmatpush1.msra.mxu0 0.0
    %505 = vmatprep.subr.mxu0 0.0
    %506 = vmatpush1.msra.mxu0 0.0
    %507 = vmatprep.subr.mxu0 0.0
    %508 = vmatpush1.msra.mxu0 %v475
    %509 = vmatprep.subr.mxu0 0.0
    %510 = vmatpush2.msra.mxu0 0.0
    %511 = vmatprep.subr.mxu0 0.0
    %512 = vmatpush2.msra.mxu0 0.0
    %513 = vmatprep.subr.mxu0 0.0
    %514 = vmatpush2.msra.mxu0 0.0
    %515 = vmatprep.subr.mxu0 0.0
    %516 = vmatpush2.msra.mxu0 0.0
    %517 = vmatprep.subr.mxu0 0.0
    %518 = vmatpush2.msra.mxu0 0.0
    %519 = vmatprep.subr.mxu0 0.0
    %520 = vmatpush2.msra.mxu0 0.0
    %521 = vmatprep.subr.mxu0 0.0
    %522 = vmatpush2.msra.mxu0 0.0
    %523 = vmatprep.subr.mxu0 0.0
    %524 = vmatpush2.msra.mxu0 0.0
    %525 = vmatprep.subr.mxu0 0.0
    %526 = vmatpush2.msra.mxu0 0.0
    %527 = vmatprep.subr.mxu0 0.0
    %528 = vmatpush2.msra.mxu0 0.0
    %529 = vmatprep.subr.mxu0 0.0
    %530 = vmatpush2.msra.mxu0 0.0
    %531 = vmatprep.subr.mxu0 0.0
    %532 = vmatpush2.msra.mxu0 0.0
    %533 = vmatprep.subr.mxu0 0.0
    %534 = vmatpush2.msra.mxu0 0.0
    %535 = vmatprep.subr.mxu0 0.0
    %536 = vmatpush2.msra.mxu0 0.0
    %537 = vmatprep.subr.mxu0 0.0
    %538 = vmatpush2.msra.mxu0 0.0
    %539 = vmatprep.subr.mxu0 0.0
    %540 = vmatpush2.msra.mxu0 0.0
    %541 = vmatprep.mubr.f32.mxu0 0.0
    %542 = vmatmul.mubr.f32.gmra.mxu0 %v471
    %v543 = vpop.f32.mrf.mxu0
    %v544 = vadd.f32 0.0, %v543
    %v545 = vpop.f32.mrf.mxu0
    %546 = vdwg.mxu0
    %v548 = vrot.slane %v544, 2
    %v550 = vadd.f32 %v544, %v548
    %v551 = vxor.u32 %v550, 2147483648
    %v552 = vmul.f32 %v551, 1.442695
    %v553 = vpow.pop %v552
    %v554 = vadd.f32 %v553, 1.0
    %v555 = vrcp.pop %v554
    %v556 = vmul.f32 1.0, %v555
    %vm557 = vcmask 517120
    %558 = vst.msk [vmem:[#allocation5] sm:$0x3] %vm557, %v556
    // Predicated region
    $region18: #{tpu_custom_call.1} parent=1 // pred_check
      _
    $region19: #{tpu_custom_call.1} parent=1 // pred_check_branch
      %560 = sbr.rel (0) target = $region21
    $region20: #{tpu_custom_call.1} parent=1 // pred_region
      %s562 = ssub.s32 32, 32
      %563 = vsyncadd [#allocation4], %s562
      %s565 = sshll.u32 [#allocation5], 4
      %s566 = int_to_ptr.vmem [resolvable:$true] %s565
      %568 = dma.vmem_to_hbm [thread:$0]  %s566, 32, %s3, [#allocation4]
    $region21: #{tpu_custom_call.1} parent=1 // pred_fallthru
      _
    // Predicated region
    $region22: #{tpu_custom_call.1} parent=1 // pred_check
      _
    $region23: #{tpu_custom_call.1} parent=1 // pred_check_branch
      %570 = sbr.rel (0) target = $region25
    $region24: #{tpu_custom_call.1} parent=1 // pred_region
      %571 = dma.done [#allocation4], 32
    $region25: #{tpu_custom_call.1} parent=1 // pred_fallthru
      _
    %572 = vsyncpa [#allocation3], 1
    %573 = vsyncpa [#allocation4], 1

</llo_original>
